<compile_context>
chip_gen: v6e
topology: v6e:2x2x1
jax: 0.10.0
libtpu: 0.0.40
codegen_flags: <defaults>
</compile_context>

<pallas_src>
import functools

import jax
import jax.numpy as jnp
from jax.experimental import pallas as pl
from jax.experimental.pallas import tpu as pltpu

DTYPE = jnp.bfloat16  # TPU-native stand-in for torch.float16 compute dtype


def _round_up(x, n):
    return ((x + n - 1) // n) * n


def _device_kind():
    try:
        return jax.devices()[0].device_kind.lower()
    except Exception:
        return ""


def _physical_vmem_bytes():
    try:
        return int(pltpu.get_tpu_info().vmem_capacity_bytes)
    except Exception:
        # Fall back on the device-kind string (v7x has 64 MiB / TensorCore).
        return (64 << 20) if "v7" in _device_kind() else (128 << 20)


def _default_tiles():
    """Per-chip (tm, tk) defaults from the roofline (see header notes)."""
    kind = _device_kind()
    if "v7" in kind:
        return 512, 256
    if "v6" in kind:
        return 640, 512
    if "v5" in kind:
        return 256, 512
    return 256, 256


def _has_megacore():
    kind = _device_kind()
    return any(t in kind for t in ("v4", "v5p", "v7"))


def _pick_tm(T, tm_pref):
    """Pick a token tile: multiple of 16, prefer a divisor of T (no x pad)."""
    tm_pref = max(16, min(tm_pref, _round_up(T, 16)))
    if T % tm_pref == 0 or tm_pref >= T:
        return tm_pref
    for cand in range(tm_pref, max(16, tm_pref // 2) - 1, -16):
        if T % cand == 0:
            return cand
    return tm_pref  # fall back to padding the tail tile


def _tile_vmem_bytes(tm, tk, hd, hd_blk, itemsize):
    """Double-buffered in/out tiles + f32 accumulator + matmul temporaries."""
    return (2 * tm * hd * itemsize          # x tile (double buffered)
            + 2 * hd * 2 * tk * itemsize    # fused gate|up weight tile
            + 2 * tk * hd_blk * itemsize    # down_proj weight tile
            + 2 * tm * hd_blk * itemsize    # output tile
            + tm * hd_blk * 4               # f32 accumulator scratch
            + 3 * tm * tk * 4)              # f32 gu / h temporaries


def prepare_mlp_weights(gate_w, up_w, down_w, *, tk=None):
    """One-time weight prep (do this at init, NOT per forward call).

    Pads the intermediate dim to a multiple of tk and interleaves gate/up
    per tk-tile into a single [hd, 2*m_pad] array so the kernel's first stage
    is ONE wide matmul per tile.  Zero padding is exact: SiLU(0)*u = 0 and the
    padded down_proj rows are zero.
    """
    if tk is None:
        _, tk = _default_tiles()
    hd, m = gate_w.shape
    tk_eff = min(tk, _round_up(m, 128))
    m_pad = _round_up(m, tk_eff)
    if m_pad != m:
        gate_w = jnp.pad(gate_w, ((0, 0), (0, m_pad - m)))
        up_w = jnp.pad(up_w, ((0, 0), (0, m_pad - m)))
        down_w = jnp.pad(down_w, ((0, m_pad - m), (0, 0)))
    nk = m_pad // tk_eff
    guw = jnp.concatenate(
        [gate_w.reshape(hd, nk, tk_eff), up_w.reshape(hd, nk, tk_eff)],
        axis=2).reshape(hd, 2 * m_pad)
    return guw, down_w, tk_eff


def mlp_kernel(x_ref, guw_ref, dw_ref, o_ref, acc_ref, *, tk):
    """Fused SwiGLU MLP tile.

    Grid = (hd splits, token tiles, intermediate tiles).  The intermediate (k)
    axis is a reduction for down_proj, so the output block stays resident and
    is accumulated in a float32 VMEM scratch across that axis.
    """
    k = pl.program_id(2)

    @pl.when(k == 0)
    def _():
        acc_ref[...] = jnp.zeros_like(acc_ref)

    x = x_ref[...]                                                # (tm, hd)
    # One wide matmul for gate+up (weights pre-interleaved per tile).
    gu = jnp.dot(x, guw_ref[...],
                 preferred_element_type=jnp.float32)              # (tm, 2tk)
    g = gu[:, :tk]                                                # (tm, tk)
    u = gu[:, tk:]                                                # (tm, tk)
    h = (g * jax.nn.sigmoid(g)) * u                               # SiLU(g)*u
    acc_ref[...] += jnp.dot(h.astype(dw_ref.dtype), dw_ref[...],
                            preferred_element_type=jnp.float32)   # (tm, hd_blk)

    @pl.when(k == pl.num_programs(2) - 1)
    def _():
        o_ref[...] = acc_ref[...].astype(o_ref.dtype)


def mlp_forward(x, guw, down_w, *, tk, tm=None, num_cores=1):
    """x: [T, hd]; guw: [hd, 2*m_pad] (per-tile interleaved gate|up);
    down_w: [m_pad, hd]; tk: tile used when interleaving guw."""
    T, hd = x.shape
    m_pad = down_w.shape[0]
    assert down_w.shape[1] == hd and guw.shape == (hd, 2 * m_pad)
    assert m_pad % tk == 0
    itemsize = jnp.dtype(x.dtype).itemsize

    if tm is None:
        tm, _ = _default_tiles()

    # Cap the VMEM request at physical capacity minus headroom; shrink tm if
    # the requested tile footprint would not fit (v7x has only 64 MiB).
    phys_vmem = _physical_vmem_bytes()
    vmem_cap = max(phys_vmem - (8 << 20), 32 << 20)
    while tm > 64 and 1.25 * _tile_vmem_bytes(tm, tk, hd, hd, itemsize) > vmem_cap:
        tm //= 2

    tm_eff = _pick_tm(T, tm)
    T_pad = _round_up(T, tm_eff)
    if T_pad != T:
        # Only taken for ragged T (no nearby multiple-of-16 divisor); padding
        # is exact, padded token rows are sliced off below.
        x = jnp.pad(x, ((0, T_pad - T), (0, 0)))

    ni = T_pad // tm_eff
    nk = m_pad // tk

    # Decode-shaped inputs (single token tile) on megacore chips: split the
    # output hd axis so the second TensorCore gets an independent accumulator.
    nh = 2 if (num_cores > 1 and ni == 1 and hd % 256 == 0) else 1
    hd_blk = hd // nh

    vmem_needed = _tile_vmem_bytes(tm_eff, tk, hd, hd_blk, itemsize)
    vmem_limit = int(min(max(int(1.25 * vmem_needed), 32 << 20), vmem_cap))

    cost = pl.CostEstimate(
        flops=6 * T_pad * hd * m_pad,
        transcendentals=T_pad * m_pad,
        # Weights are re-streamed once per token tile (guw once per hd split);
        # activations are read/written once.
        bytes_accessed=itemsize * (2 * T_pad * hd
                                   + ni * (2 * nh + 1) * hd * m_pad),
    )

    out = pl.pallas_call(
        functools.partial(mlp_kernel, tk=tk),
        out_shape=jax.ShapeDtypeStruct((T_pad, hd), x.dtype),
        grid_spec=pltpu.PrefetchScalarGridSpec(
            num_scalar_prefetch=0,
            grid=(nh, ni, nk),
            in_specs=[
                pl.BlockSpec((tm_eff, hd), lambda h, i, k: (i, 0)),    # x tile
                pl.BlockSpec((hd, 2 * tk), lambda h, i, k: (0, k)),    # gate|up
                pl.BlockSpec((tk, hd_blk), lambda h, i, k: (k, h)),    # down_w
            ],
            out_specs=pl.BlockSpec((tm_eff, hd_blk), lambda h, i, k: (i, h)),
            scratch_shapes=[pltpu.VMEM((tm_eff, hd_blk), jnp.float32)],
        ),
        compiler_params=pltpu.CompilerParams(
            dimension_semantics=("parallel", "parallel", "arbitrary"),
            vmem_limit_bytes=vmem_limit),
        cost_estimate=cost,
    )(x, guw, down_w)

    return out[:T]


class MLP:
    """JAX/Pallas port of the PyTorch MLP (SwiGLU, no biases)."""

    def __init__(self, hd=256, m=512, key=jax.random.PRNGKey(0), dtype=DTYPE):
        k1, k2, k3 = jax.random.split(key, 3)
        gate_w = (jax.random.normal(k1, (hd, m), jnp.float32)
                  * (hd ** -0.5)).astype(dtype)
        up_w = (jax.random.normal(k2, (hd, m), jnp.float32)
                * (hd ** -0.5)).astype(dtype)
        down_w = (jax.random.normal(k3, (m, hd), jnp.float32)
                  * (m ** -0.5)).astype(dtype)
        # Unfused copies kept only for reference checks.
        self.gate_w, self.up_w, self.down_w = gate_w, up_w, down_w
        # Per-chip tile defaults; weight padding + gate/up interleave done
        # ONCE here so forward() never re-materializes weights in HBM.
        self.tm, tk = _default_tiles()
        self.guw, self.down_w_pad, self.tk = prepare_mlp_weights(
            gate_w, up_w, down_w, tk=tk)
        self.num_cores = 2 if _has_megacore() else 1

    def __call__(self, x, *, tm=None):
        B, S, hd = x.shape
        out = mlp_forward(
            x.reshape(B * S, hd), self.guw, self.down_w_pad,
            tk=self.tk, tm=self.tm if tm is None else tm,
            num_cores=self.num_cores)
        return out.reshape(B, S, hd)


if __name__ == "__main__":
    key = jax.random.PRNGKey(0)
    kx, kp = jax.random.split(key)

    # Small shapes consistent with the module's forward (hd / m scaled down).
    B, S, hd, m = 2, 8, 256, 512
    x = jax.random.normal(kx, (B, S, hd), jnp.float32).astype(DTYPE)

    mlp = MLP(hd=hd, m=m, key=kp)
    out = jax.block_until_ready(mlp(x))
    assert out.shape == (B, S, hd) and out.dtype == DTYPE

    # Pure-JAX reference check of the fused kernel.
    xf = x.astype(jnp.float32).reshape(B * S, hd)
    g = xf @ mlp.gate_w.astype(jnp.float32)
    u = xf @ mlp.up_w.astype(jnp.float32)
    ref = ((g * jax.nn.sigmoid(g)) * u) @ mlp.down_w.astype(jnp.float32)
    ref = ref.reshape(B, S, hd)
    assert jnp.allclose(out.astype(jnp.float32), ref, atol=0.5, rtol=0.1), \
        "kernel output mismatch vs reference"

    print("KERNEL_OK")
</pallas_src>

<mosaic_0001>
module attributes {stable_mosaic.version = 11 : i64} {
  func.func @mlp_kernel(%arg0: i32, %arg1: i32, %arg2: i32, %arg3: memref<16x256xbf16, #tpu.memory_space<vmem>>, %arg4: memref<256x512xbf16, #tpu.memory_space<vmem>>, %arg5: memref<256x256xbf16, #tpu.memory_space<vmem>>, %arg6: memref<16x256xbf16, #tpu.memory_space<vmem>>, %arg7: memref<16x256xf32, #tpu.memory_space<vmem>>) attributes {dimension_semantics = [#tpu.dimension_semantics<parallel>, #tpu.dimension_semantics<parallel>, #tpu.dimension_semantics<arbitrary>], iteration_bounds = array<i64: 1, 1, 2>, scalar_prefetch = 0 : i64, scratch_operands = 1 : i64, tpu.core_type = #tpu.core_type<tc>, window_params = [{transform_indices = @transform_0, window_bounds = array<i64: 16, 256>}, {transform_indices = @transform_1, window_bounds = array<i64: 256, 512>}, {transform_indices = @transform_2, window_bounds = array<i64: 256, 256>}, {transform_indices = @transform_3, window_bounds = array<i64: 16, 256>}]} {
    %c0_i32 = arith.constant 0 : i32
    %0 = arith.cmpi eq, %arg2, %c0_i32 : i32
    %1 = arith.extui %0 : i1 to i32
    %c0_i32_0 = arith.constant 0 : i32
    %2 = arith.cmpi ne, %1, %c0_i32_0 : i32
    scf.if %2 {
      %cst_13 = arith.constant 0.000000e+00 : f32
      %24 = vector.broadcast %cst_13 : f32 to vector<16x256xf32>
      %c0_14 = arith.constant 0 : index
      %c0_15 = arith.constant 0 : index
      %25 = vector.load %arg7[%c0_14, %c0_15] : memref<16x256xf32, #tpu.memory_space<vmem>>, vector<16x256xf32>
      tpu.vector_store %arg7[%c0_14, %c0_15], %24 {strides = array<i32>} : memref<16x256xf32, #tpu.memory_space<vmem>>, vector<16x256xf32>,
    } else {
    }
    %c0 = arith.constant 0 : index
    %c0_1 = arith.constant 0 : index
    %3 = vector.load %arg3[%c0, %c0_1] : memref<16x256xbf16, #tpu.memory_space<vmem>>, vector<16x256xbf16>
    %c0_2 = arith.constant 0 : index
    %c0_3 = arith.constant 0 : index
    %4 = vector.load %arg4[%c0_2, %c0_3] : memref<256x512xbf16, #tpu.memory_space<vmem>>, vector<256x512xbf16>
    %cst = arith.constant dense<0.000000e+00> : vector<16x512xf32>
    %5 = tpu.matmul %3, %4, %cst {dimension_numbers = #tpu.dot_dimension_numbers<[1], [0], [0], [1], [0, 0, 1, 1], [], []>} : vector<16x256xbf16>, vector<256x512xbf16>, vector<16x512xf32> -> vector<16x512xf32>
    %6 = vector.extract_strided_slice %5 {offsets = [0, 0], sizes = [16, 256], strides = [1, 1]} : vector<16x512xf32> to vector<16x256xf32>
    %7 = vector.extract_strided_slice %5 {offsets = [0, 256], sizes = [16, 256], strides = [1, 1]} : vector<16x512xf32> to vector<16x256xf32>
    %8 = arith.negf %6 : vector<16x256xf32>
    %9 = math.exp %8 : vector<16x256xf32>
    %cst_4 = arith.constant 1.000000e+00 : f32
    %10 = vector.broadcast %cst_4 : f32 to vector<16x256xf32>
    %11 = arith.addf %10, %9 : vector<16x256xf32>
    %12 = arith.divf %10, %11 : vector<16x256xf32>
    %13 = arith.mulf %6, %12 : vector<16x256xf32>
    %14 = arith.mulf %13, %7 : vector<16x256xf32>
    %c0_5 = arith.constant 0 : index
    %c0_6 = arith.constant 0 : index
    %15 = vector.load %arg7[%c0_5, %c0_6] : memref<16x256xf32, #tpu.memory_space<vmem>>, vector<16x256xf32>
    %16 = arith.truncf %14 : vector<16x256xf32> to vector<16x256xbf16>
    %c0_7 = arith.constant 0 : index
    %c0_8 = arith.constant 0 : index
    %17 = vector.load %arg5[%c0_7, %c0_8] : memref<256x256xbf16, #tpu.memory_space<vmem>>, vector<256x256xbf16>
    %cst_9 = arith.constant dense<0.000000e+00> : vector<16x256xf32>
    %18 = tpu.matmul %16, %17, %cst_9 {dimension_numbers = #tpu.dot_dimension_numbers<[1], [0], [0], [1], [0, 0, 1, 1], [], []>} : vector<16x256xbf16>, vector<256x256xbf16>, vector<16x256xf32> -> vector<16x256xf32>
    %19 = arith.addf %15, %18 : vector<16x256xf32>
    %c0_10 = arith.constant 0 : index
    %c0_11 = arith.constant 0 : index
    %20 = vector.load %arg7[%c0_10, %c0_11] : memref<16x256xf32, #tpu.memory_space<vmem>>, vector<16x256xf32>
    tpu.vector_store %arg7[%c0_10, %c0_11], %19 {strides = array<i32>} : memref<16x256xf32, #tpu.memory_space<vmem>>, vector<16x256xf32>,
    %c1_i32 = arith.constant 1 : i32
    %21 = arith.cmpi eq, %arg2, %c1_i32 : i32
    %22 = arith.extui %21 : i1 to i32
    %c0_i32_12 = arith.constant 0 : i32
    %23 = arith.cmpi ne, %22, %c0_i32_12 : i32
    scf.if %23 {
      %c0_13 = arith.constant 0 : index
      %c0_14 = arith.constant 0 : index
      %24 = vector.load %arg7[%c0_13, %c0_14] : memref<16x256xf32, #tpu.memory_space<vmem>>, vector<16x256xf32>
      %25 = arith.truncf %24 : vector<16x256xf32> to vector<16x256xbf16>
      %c0_15 = arith.constant 0 : index
      %c0_16 = arith.constant 0 : index
      %26 = vector.load %arg6[%c0_15, %c0_16] : memref<16x256xbf16, #tpu.memory_space<vmem>>, vector<16x256xbf16>
      tpu.vector_store %arg6[%c0_15, %c0_16], %25 {strides = array<i32>} : memref<16x256xbf16, #tpu.memory_space<vmem>>, vector<16x256xbf16>,
    } else {
    }
    return
  }
  func.func @transform_0(%arg0: i32, %arg1: i32, %arg2: i32) -> (i32, i32) {
    %c0_i32 = arith.constant 0 : i32
    %c0_i32_0 = arith.constant 0 : i32
    return %arg1, %c0_i32 : i32, i32
  }
  func.func @transform_1(%arg0: i32, %arg1: i32, %arg2: i32) -> (i32, i32) {
    %c0_i32 = arith.constant 0 : i32
    %c0_i32_0 = arith.constant 0 : i32
    return %c0_i32, %arg2 : i32, i32
  }
  func.func @transform_2(%arg0: i32, %arg1: i32, %arg2: i32) -> (i32, i32) {
    %c0_i32 = arith.constant 0 : i32
    return %arg2, %arg0 : i32, i32
  }
  func.func @transform_3(%arg0: i32, %arg1: i32, %arg2: i32) -> (i32, i32) {
    %c0_i32 = arith.constant 0 : i32
    return %arg1, %arg0 : i32, i32
  }
}

</mosaic_0001>

<llo_original>
// kernel: tpu_custom_call.1
$region0: #{tpu_custom_call.1}
  #allocation0 [shape = 'u32[]', space=smem, size = 0x4, offset = 0x4, fixed_abs, tag = 'smem constant byte address 0x4 - core index']
  #allocation1 [shape = 'u32[144,128]{1,0:T(1,128)}', space=vmem, size = 0x12000, scoped, tag = 'internal scratch']
  #allocation2 [shape = 'f32[16,256]{1,0:T(8,128)}', space=vmem, size = 0x4000, scoped, tag = 'scratch operand']
  %s0 = inlined_call_operand.hbm [shape: bf16[16,256], index: 0, kind: input, shape index: {}]
  %s1 = inlined_call_operand.hbm [shape: bf16[256,1024], index: 1, kind: input, shape index: {}]
  %s2 = inlined_call_operand.hbm [shape: bf16[512,256], index: 2, kind: input, shape index: {}]
  %s3 = inlined_call_operand.hbm [shape: bf16[16,256], index: 3, kind: output, shape index: {}]
  %s4 = sld [smem:[#allocation0]]
  $region65: #{tpu_custom_call.1} parent=0
    _
  %s6 = ssub.s32 1, %s4
  %s7 = scalar_select 0, %s6, %s4
  $region1: #{tpu_custom_call.1} parent=0
    #allocation3 [shape = 'u8[8192]{0}', space=vmem, size = 0x2000, scoped, tag = 'input window, operand 0, single buffered']
    #allocation4 [shape = 's32[2]{0}', space=sflag, size = 0x8, scoped, tag = 'scoped memory for tpu_custom_call.1']
    #allocation5 [shape = 's32[2]{0}', space=sflag, size = 0x8, scoped, tag = 'scoped memory for tpu_custom_call.1']
    #allocation6 [shape = 'u8[524288]{0}', space=vmem, size = 0x80000, scoped, tag = 'input window, operand 1']
    #allocation7 [shape = 's32[2]{0}', space=sflag, size = 0x8, scoped, tag = 'scoped memory for tpu_custom_call.1']
    #allocation8 [shape = 'u8[262144]{0}', space=vmem, size = 0x40000, scoped, tag = 'input window, operand 2']
    #allocation9 [shape = 'u8[8192]{0}', space=vmem, size = 0x2000, scoped, tag = 'output window, operand 0, single buffered']
    %8 = vsyncpa [#allocation4], 0
    %9 = vsyncpa [#allocation7], 0
    %s10 = scalar_lea.sflag [#allocation7], 1
    %11 = vsyncpa %s10, 0
    %12 = vsyncpa [#allocation5], 0
    loop: start=0, step=1, limit=4
    $region2: #{tpu_custom_call.1} parent=1 // loop_pre_header
      _
    $region3: #{tpu_custom_call.1} parent=1 // loop_header
      %s14 = sphi 0, %s18
      %p15 = scmp.ge.s32.totalorder %s14, 4
      %s21 = sphi 0, %s40
      %s22 = sphi 0, %s36
      %s23 = sphi 0, %s32
      %s24 = sphi 0, %s21
      %s25 = sphi 0, %s22
      %s26 = sphi 0, %s23
      %s27 = sphi 0, %s24
      %s28 = sphi 0, %s25
      %s29 = sphi 0, %s26
      %s43 = sphi 0, %s45
      %s46 = sphi 0, %s43
      %s47 = sphi 0, %s46
      %s63 = sphi 0, %s47
      %s69 = sphi 0, %s71
      %s72 = sphi 0, %s69
      %s73 = sphi 0, %s72
      %s89 = sphi 0, %s73
      %s97 = sphi 0, %s99
      %s100 = sphi 0, %s97
      %s101 = sphi 0, %s100
      %s117 = sphi 0, %s101
      %s125 = sphi 0, %s127
      %s128 = sphi 0, %s125
      %s129 = sphi 0, %s128
      %s145 = sphi 0, %s129
    $region4: #{tpu_custom_call.1} parent=1 // loop_header_branch
      %17 = sbr.rel (%p15) target = $region8
    $region5: #{tpu_custom_call.1} parent=1 // loop_body
      %s19 = ssub.s32 %s14, 1
      %s20 = ssub.s32 %s14, 2
      %s30 = sadd.s32 1, %s23
      %p31 = scmp.ge.s32.totalorder %s30, 2
      %s32 = scalar_select %p31, 0, %s30
      %s33 = sadd.s32 1, %s22
      %s34 = scalar_select %p31, %s33, %s22
      %p35 = scmp.ge.s32.totalorder %s34, 1
      %s36 = scalar_select %p35, 0, %s34
      %s37 = sadd.s32 1, %s21
      %s38 = scalar_select %p35, %s37, %s21
      %p39 = scmp.ge.s32.totalorder %s38, 1
      %s40 = scalar_select %p39, 0, %s38
      %s41 = ssub.s32 %s22, %s36
      %p42 = scmp.eq.s32.totalorder %s41, 0
      %s44 = sadd.s32 %s43, 1
      %s45 = scalar_select %p42, %s43, %s44
      %p48 = pneg %p42
      %p49 = scmp.eq.s32.totalorder %s14, 1
      %p50 = por %p48, %p49
      %p51 = scmp.ne.s32.totalorder %s43, %s46
      %p52 = scmp.eq.s32.totalorder %s14, 0
      %p53 = por %p51, %p52
      %p54 = scmp.ne.s32.totalorder %s43, %s46
      %p55 = scmp.eq.s32.totalorder %s19, 1
      %p56 = por %p54, %p55
      %p57 = scmp.ne.s32.totalorder %s46, %s47
      %p58 = scmp.eq.s32.totalorder %s19, 0
      %p59 = por %p57, %p58
      %p60 = scmp.ne.s32.totalorder %s46, %s47
      %p61 = scmp.eq.s32.totalorder %s20, 1
      %p62 = por %p60, %p61
      %p64 = scmp.ne.s32.totalorder %s47, %s63
      %p65 = scmp.eq.s32.totalorder %s20, 0
      %p66 = por %p64, %p65
      %s67 = ssub.s32 %s23, %s32
      %p68 = scmp.eq.s32.totalorder %s67, 0
      %s70 = sadd.s32 %s69, 1
      %s71 = scalar_select %p68, %s69, %s70
      %p74 = pneg %p68
      %p75 = scmp.eq.s32.totalorder %s14, 1
      %p76 = por %p74, %p75
      %p77 = scmp.ne.s32.totalorder %s69, %s72
      %p78 = scmp.eq.s32.totalorder %s14, 0
      %p79 = por %p77, %p78
      %p80 = scmp.ne.s32.totalorder %s69, %s72
      %p81 = scmp.eq.s32.totalorder %s19, 1
      %p82 = por %p80, %p81
      %p83 = scmp.ne.s32.totalorder %s72, %s73
      %p84 = scmp.eq.s32.totalorder %s19, 0
      %p85 = por %p83, %p84
      %p86 = scmp.ne.s32.totalorder %s72, %s73
      %p87 = scmp.eq.s32.totalorder %s20, 1
      %p88 = por %p86, %p87
      %p90 = scmp.ne.s32.totalorder %s73, %s89
      %p91 = scmp.eq.s32.totalorder %s20, 0
      %p92 = por %p90, %p91
      %s93 = ssub.s32 %s23, %s32
      %s94 = ssub.s32 %s21, %s40
      %s95 = sor.u32 %s93, %s94
      %p96 = scmp.eq.s32.totalorder %s95, 0
      %s98 = sadd.s32 %s97, 1
      %s99 = scalar_select %p96, %s97, %s98
      %p102 = pneg %p96
      %p103 = scmp.eq.s32.totalorder %s14, 1
      %p104 = por %p102, %p103
      %p105 = scmp.ne.s32.totalorder %s97, %s100
      %p106 = scmp.eq.s32.totalorder %s14, 0
      %p107 = por %p105, %p106
      %p108 = scmp.ne.s32.totalorder %s97, %s100
      %p109 = scmp.eq.s32.totalorder %s19, 1
      %p110 = por %p108, %p109
      %p111 = scmp.ne.s32.totalorder %s100, %s101
      %p112 = scmp.eq.s32.totalorder %s19, 0
      %p113 = por %p111, %p112
      %p114 = scmp.ne.s32.totalorder %s100, %s101
      %p115 = scmp.eq.s32.totalorder %s20, 1
      %p116 = por %p114, %p115
      %p118 = scmp.ne.s32.totalorder %s101, %s117
      %p119 = scmp.eq.s32.totalorder %s20, 0
      %p120 = por %p118, %p119
      %s121 = ssub.s32 %s22, %s36
      %s122 = ssub.s32 %s21, %s40
      %s123 = sor.u32 %s121, %s122
      %p124 = scmp.eq.s32.totalorder %s123, 0
      %s126 = sadd.s32 %s125, 1
      %s127 = scalar_select %p124, %s125, %s126
      %p130 = pneg %p124
      %p131 = scmp.eq.s32.totalorder %s14, 1
      %p132 = por %p130, %p131
      %p133 = scmp.ne.s32.totalorder %s125, %s128
      %p134 = scmp.eq.s32.totalorder %s14, 0
      %p135 = por %p133, %p134
      %p136 = scmp.ne.s32.totalorder %s125, %s128
      %p137 = scmp.eq.s32.totalorder %s19, 1
      %p138 = por %p136, %p137
      %p139 = scmp.ne.s32.totalorder %s128, %s129
      %p140 = scmp.eq.s32.totalorder %s19, 0
      %p141 = por %p139, %p140
      %p142 = scmp.ne.s32.totalorder %s128, %s129
      %p143 = scmp.eq.s32.totalorder %s20, 1
      %p144 = por %p142, %p143
      %p146 = scmp.ne.s32.totalorder %s129, %s145
      %p147 = scmp.eq.s32.totalorder %s20, 0
      %p148 = por %p146, %p147
      %p149 = scmp.le.s32.totalorder 1, %s14
      %p150 = scmp.lt.s32.totalorder %s14, 3
      %p151 = pnand %p149, %p150
      %p152 = pneg %p151
      // Predicated region
      $region9: #{tpu_custom_call.1} parent=5 // pred_check
        _
      $region10: #{tpu_custom_call.1} parent=5 // pred_check_branch
        %154 = sbr.rel (%p151) target = $region12
      $region11: #{tpu_custom_call.1} parent=5 // pred_region
        %s155 = ssub.s32 %s14, 1
        // Predicated region
        $region13: #{tpu_custom_call.1} parent=11 // pred_check
          %p156 = pneg %p59
        $region14: #{tpu_custom_call.1} parent=11 // pred_check_branch
          %158 = sbr.rel (%p156) target = $region16
        $region15: #{tpu_custom_call.1} parent=11 // pred_region
          %s159 = smul.u32 2, %s25
          %s161 = ssub.s32 256, 256
          %162 = vsyncadd [#allocation4], %s161
          %s163 = smul.addr %s159, 2
          %s164 = smul.addr %s163, 64
          %s165 = scalar_lea.hbm %s0, %s164
          %s166 = sshll.u32 [#allocation3], 4
          %s167 = int_to_ptr.vmem [resolvable:$true] %s166
          %172 = dma.hbm_to_vmem [thread:$0]  %s165, 256, %s167, [#allocation4], 128, 128, 8
        $region16: #{tpu_custom_call.1} parent=11 // pred_fallthru
          _
      $region12: #{tpu_custom_call.1} parent=5 // pred_fallthru
        _
      %p173 = scmp.lt.s32.totalorder %s14, 2
      // Predicated region
      $region17: #{tpu_custom_call.1} parent=5 // pred_check
        %p174 = pneg %p173
      $region18: #{tpu_custom_call.1} parent=5 // pred_check_branch
        %176 = sbr.rel (%p174) target = $region20
      $region19: #{tpu_custom_call.1} parent=5 // pred_region
        // Predicated region
        $region21: #{tpu_custom_call.1} parent=19 // pred_check
          %p177 = pneg %p79
        $region22: #{tpu_custom_call.1} parent=19 // pred_check_branch
          %179 = sbr.rel (%p177) target = $region24
        $region23: #{tpu_custom_call.1} parent=19 // pred_region
          %s180 = sand.u32 %s14, 1
          %s181 = scalar_lea.sflag [#allocation7], %s180
          %s182 = sand.u32 %s69, 1
          %s183 = smul.addr %s182, 512
          %s184 = scalar_lea.vmem [#allocation6], %s183
          %s185 = smul.u32 4, %s23
          %s187 = ssub.s32 8192, 8192
          %188 = vsyncadd %s181, %s187
          %s189 = smul.addr %s185, 64
          %s190 = scalar_lea.hbm %s1, %s189
          %s191 = sshll.u32 %s184, 4
          %s192 = int_to_ptr.vmem [resolvable:$true] %s191
          %197 = dma.hbm_to_vmem [thread:$0]  %s190, 8192, %s192, %s181, 512, 256, 16
        $region24: #{tpu_custom_call.1} parent=19 // pred_fallthru
          _
        // Predicated region
        $region25: #{tpu_custom_call.1} parent=19 // pred_check
          %p198 = pneg %p107
        $region26: #{tpu_custom_call.1} parent=19 // pred_check_branch
          %200 = sbr.rel (%p198) target = $region28
        $region27: #{tpu_custom_call.1} parent=19 // pred_region
          %s201 = sand.u32 %s14, 1
          %s202 = scalar_lea.sflag [#allocation7], %s201
          %s203 = sand.u32 %s97, 1
          %s204 = smul.addr %s203, 256
          %s205 = scalar_lea.vmem [#allocation8], %s204
          %s206 = smul.u32 32, %s23
          %s207 = smul.u32 2, %s21
          %s209 = ssub.s32 4096, 4096
          %210 = vsyncadd %s202, %s209
          %s211 = smul.addr %s206, 2
          %s212 = sadd.s32 %s207, %s211
          %s213 = smul.addr %s212, 64
          %s214 = scalar_lea.hbm %s2, %s213
          %s215 = sshll.u32 %s205, 4
          %s216 = int_to_ptr.vmem [resolvable:$true] %s215
          %221 = dma.hbm_to_vmem [thread:$0]  %s214, 4096, %s216, %s202, 128, 128, 8
        $region28: #{tpu_custom_call.1} parent=19 // pred_fallthru
          _
      $region20: #{tpu_custom_call.1} parent=5 // pred_fallthru
        _
      %p222 = scmp.le.s32.totalorder 1, %s14
      %p223 = scmp.lt.s32.totalorder %s14, 3
      %p224 = pnand %p222, %p223
      %p225 = pneg %p224
      // Predicated region
      $region29: #{tpu_custom_call.1} parent=5 // pred_check
        _
      $region30: #{tpu_custom_call.1} parent=5 // pred_check_branch
        %227 = sbr.rel (%p224) target = $region32
      $region31: #{tpu_custom_call.1} parent=5 // pred_region
        %s228 = ssub.s32 %s14, 1
        // Predicated region
        $region33: #{tpu_custom_call.1} parent=31 // pred_check
          %p229 = pneg %p59
        $region34: #{tpu_custom_call.1} parent=31 // pred_check_branch
          %231 = sbr.rel (%p229) target = $region36
        $region35: #{tpu_custom_call.1} parent=31 // pred_region
          %232 = dma.done [#allocation4], 256
        $region36: #{tpu_custom_call.1} parent=31 // pred_fallthru
          _
        %s233 = sand.u32 %s19, 1
        %s234 = scalar_lea.sflag [#allocation7], %s233
        %s235 = sand.u32 %s72, 1
        %s236 = smul.addr %s235, 512
        %s237 = scalar_lea.vmem [#allocation6], %s236
        // Predicated region
        $region37: #{tpu_custom_call.1} parent=31 // pred_check
          %p238 = pneg %p85
        $region38: #{tpu_custom_call.1} parent=31 // pred_check_branch
          %240 = sbr.rel (%p238) target = $region40
        $region39: #{tpu_custom_call.1} parent=31 // pred_region
          %241 = dma.done %s234, 8192
        $region40: #{tpu_custom_call.1} parent=31 // pred_fallthru
          _
        %s242 = sand.u32 %s19, 1
        %s243 = scalar_lea.sflag [#allocation7], %s242
        %s244 = sand.u32 %s100, 1
        %s245 = smul.addr %s244, 256
        %s246 = scalar_lea.vmem [#allocation8], %s245
        // Predicated region
        $region41: #{tpu_custom_call.1} parent=31 // pred_check
          %p247 = pneg %p113
        $region42: #{tpu_custom_call.1} parent=31 // pred_check_branch
          %249 = sbr.rel (%p247) target = $region44
        $region43: #{tpu_custom_call.1} parent=31 // pred_region
          %250 = dma.done %s243, 4096
        $region44: #{tpu_custom_call.1} parent=31 // pred_fallthru
          _
        %p251 = pneg %p59
        %p252 = pneg %p56
        %s253 = sand.u32 %s19, 1
        %s254 = scalar_lea.sflag [#allocation7], %s253
        %s255 = sand.u32 %s72, 1
        %s256 = smul.addr %s255, 512
        %s257 = scalar_lea.vmem [#allocation6], %s256
        %p258 = pneg %p85
        %p259 = pneg %p82
        %s260 = sand.u32 %s19, 1
        %s261 = scalar_lea.sflag [#allocation7], %s260
        %s262 = sand.u32 %s100, 1
        %s263 = smul.addr %s262, 256
        %s264 = scalar_lea.vmem [#allocation8], %s263
        %p265 = pneg %p113
        %p266 = pneg %p110
        %p267 = pneg %p141
        %p268 = pneg %p138
        %s269 = smul.u32 2, %s25
        %s270 = smul.u32 4, %s26
        %s271 = smul.u32 32, %s26
        %s272 = smul.u32 2, %s24
        %s273 = smul.u32 2, %s25
        %s274 = smul.u32 2, %s24
        %p275 = scmp.eq.s32.totalorder %s26, 0
        // Predicated region
        $region45: #{tpu_custom_call.1} parent=31 // pred_check
          %p276 = pneg %p275
        $region46: #{tpu_custom_call.1} parent=31 // pred_check_branch
          %278 = sbr.rel (%p276) target = $region48
        $region47: #{tpu_custom_call.1} parent=31 // pred_region
          %279 = vst [vmem:[#allocation2] sm:$0xff] 0.0
          %280 = vst [vmem:[#allocation2 + $0x8] sm:$0xff] 0.0
          %281 = vst [vmem:[#allocation2 + $0x10] sm:$0xff] 0.0
          %282 = vst [vmem:[#allocation2 + $0x18] sm:$0xff] 0.0
        $region48: #{tpu_custom_call.1} parent=31 // pred_fallthru
          _
        %v283 = vld [vmem:[#allocation3] sm:$0xff]
        %v284 = vld [vmem:[#allocation3 + $0x8] sm:$0xff]
        %v285 = vld [vmem:[%s237] sm:$0xff]
        %v286 = vld [vmem:[%s237 + $0x8] sm:$0xff]
        %v287 = vld [vmem:[%s237 + $0x10] sm:$0xff]
        %v288 = vld [vmem:[%s237 + $0x18] sm:$0xff]
        %v289 = vld [vmem:[%s237 + $0x20] sm:$0xff]
        %v290 = vld [vmem:[%s237 + $0x28] sm:$0xff]
        %v291 = vld [vmem:[%s237 + $0x30] sm:$0xff]
        %v292 = vld [vmem:[%s237 + $0x38] sm:$0xff]
        %v293 = vld [vmem:[%s237 + $0x40] sm:$0xff]
        %v294 = vld [vmem:[%s237 + $0x48] sm:$0xff]
        %v295 = vld [vmem:[%s237 + $0x50] sm:$0xff]
        %v296 = vld [vmem:[%s237 + $0x58] sm:$0xff]
        %v297 = vld [vmem:[%s237 + $0x60] sm:$0xff]
        %v298 = vld [vmem:[%s237 + $0x68] sm:$0xff]
        %v299 = vld [vmem:[%s237 + $0x70] sm:$0xff]
        %v300 = vld [vmem:[%s237 + $0x78] sm:$0xff]
        %v301 = vld [vmem:[%s237 + $0x80] sm:$0xff]
        %v302 = vld [vmem:[%s237 + $0x88] sm:$0xff]
        %v303 = vld [vmem:[%s237 + $0x90] sm:$0xff]
        %v304 = vld [vmem:[%s237 + $0x98] sm:$0xff]
        %v305 = vld [vmem:[%s237 + $0xa0] sm:$0xff]
        %v306 = vld [vmem:[%s237 + $0xa8] sm:$0xff]
        %v307 = vld [vmem:[%s237 + $0xb0] sm:$0xff]
        %v308 = vld [vmem:[%s237 + $0xb8] sm:$0xff]
        %v309 = vld [vmem:[%s237 + $0xc0] sm:$0xff]
        %v310 = vld [vmem:[%s237 + $0xc8] sm:$0xff]
        %v311 = vld [vmem:[%s237 + $0xd0] sm:$0xff]
        %v312 = vld [vmem:[%s237 + $0xd8] sm:$0xff]
        %v313 = vld [vmem:[%s237 + $0xe0] sm:$0xff]
        %v314 = vld [vmem:[%s237 + $0xe8] sm:$0xff]
        %v315 = vld [vmem:[%s237 + $0xf0] sm:$0xff]
        %v316 = vld [vmem:[%s237 + $0xf8] sm:$0xff]
        %v317 = vld [vmem:[%s237 + $0x100] sm:$0xff]
        %v318 = vld [vmem:[%s237 + $0x108] sm:$0xff]
        %v319 = vld [vmem:[%s237 + $0x110] sm:$0xff]
        %v320 = vld [vmem:[%s237 + $0x118] sm:$0xff]
        %v321 = vld [vmem:[%s237 + $0x120] sm:$0xff]
        %v322 = vld [vmem:[%s237 + $0x128] sm:$0xff]
        %v323 = vld [vmem:[%s237 + $0x130] sm:$0xff]
        %v324 = vld [vmem:[%s237 + $0x138] sm:$0xff]
        %v325 = vld [vmem:[%s237 + $0x140] sm:$0xff]
        %v326 = vld [vmem:[%s237 + $0x148] sm:$0xff]
        %v327 = vld [vmem:[%s237 + $0x150] sm:$0xff]
        %v328 = vld [vmem:[%s237 + $0x158] sm:$0xff]
        %v329 = vld [vmem:[%s237 + $0x160] sm:$0xff]
        %v330 = vld [vmem:[%s237 + $0x168] sm:$0xff]
        %v331 = vld [vmem:[%s237 + $0x170] sm:$0xff]
        %v332 = vld [vmem:[%s237 + $0x178] sm:$0xff]
        %v333 = vld [vmem:[%s237 + $0x180] sm:$0xff]
        %v334 = vld [vmem:[%s237 + $0x188] sm:$0xff]
        %v335 = vld [vmem:[%s237 + $0x190] sm:$0xff]
        %v336 = vld [vmem:[%s237 + $0x198] sm:$0xff]
        %v337 = vld [vmem:[%s237 + $0x1a0] sm:$0xff]
        %v338 = vld [vmem:[%s237 + $0x1a8] sm:$0xff]
        %v339 = vld [vmem:[%s237 + $0x1b0] sm:$0xff]
        %v340 = vld [vmem:[%s237 + $0x1b8] sm:$0xff]
        %v341 = vld [vmem:[%s237 + $0x1c0] sm:$0xff]
        %v342 = vld [vmem:[%s237 + $0x1c8] sm:$0xff]
        %v343 = vld [vmem:[%s237 + $0x1d0] sm:$0xff]
        %v344 = vld [vmem:[%s237 + $0x1d8] sm:$0xff]
        %v345 = vld [vmem:[%s237 + $0x1e0] sm:$0xff]
        %v346 = vld [vmem:[%s237 + $0x1e8] sm:$0xff]
        %v347 = vld [vmem:[%s237 + $0x1f0] sm:$0xff]
        %v348 = vld [vmem:[%s237 + $0x1f8] sm:$0xff]
        %v351 = vunpack.c.l.b16 %v283
        %v352 = vunpack.c.h.b16 %v283
        %v353 = vunpack.c.l.b16 %v284
        %v354 = vunpack.c.h.b16 %v284
        %v355 = vpack.c.b16 %v353, %v351
        %v356 = vpack.c.b16 %v354, %v352
        %v423 = vunpack.c.l.b16 %v285
        %v424 = vunpack.c.h.b16 %v285
        %v425 = vunpack.c.l.b16 %v286
        %v426 = vunpack.c.h.b16 %v286
        %v427 = vunpack.c.l.b16 %v287
        %v428 = vunpack.c.h.b16 %v287
        %v429 = vunpack.c.l.b16 %v288
        %v430 = vunpack.c.h.b16 %v288
        %v431 = vunpack.c.l.b16 %v289
        %v432 = vunpack.c.h.b16 %v289
        %v433 = vunpack.c.l.b16 %v290
        %v434 = vunpack.c.h.b16 %v290
        %v435 = vunpack.c.l.b16 %v291
        %v436 = vunpack.c.h.b16 %v291
        %v437 = vunpack.c.l.b16 %v292
        %v438 = vunpack.c.h.b16 %v292
        %v439 = vunpack.c.l.b16 %v293
        %v440 = vunpack.c.h.b16 %v293
        %v441 = vunpack.c.l.b16 %v294
        %v442 = vunpack.c.h.b16 %v294
        %v443 = vunpack.c.l.b16 %v295
        %v444 = vunpack.c.h.b16 %v295
        %v445 = vunpack.c.l.b16 %v296
        %v446 = vunpack.c.h.b16 %v296
        %v447 = vunpack.c.l.b16 %v297
        %v448 = vunpack.c.h.b16 %v297
        %v449 = vunpack.c.l.b16 %v298
        %v450 = vunpack.c.h.b16 %v298
        %v451 = vunpack.c.l.b16 %v299
        %v452 = vunpack.c.h.b16 %v299
        %v453 = vunpack.c.l.b16 %v300
        %v454 = vunpack.c.h.b16 %v300
        %v455 = vunpack.c.l.b16 %v301
        %v456 = vunpack.c.h.b16 %v301
        %v457 = vunpack.c.l.b16 %v302
        %v458 = vunpack.c.h.b16 %v302
        %v459 = vunpack.c.l.b16 %v303
        %v460 = vunpack.c.h.b16 %v303
        %v461 = vunpack.c.l.b16 %v304
        %v462 = vunpack.c.h.b16 %v304
        %v463 = vunpack.c.l.b16 %v305
        %v464 = vunpack.c.h.b16 %v305
        %v465 = vunpack.c.l.b16 %v306
        %v466 = vunpack.c.h.b16 %v306
        %v467 = vunpack.c.l.b16 %v307
        %v468 = vunpack.c.h.b16 %v307
        %v469 = vunpack.c.l.b16 %v308
        %v470 = vunpack.c.h.b16 %v308
        %v471 = vunpack.c.l.b16 %v309
        %v472 = vunpack.c.h.b16 %v309
        %v473 = vunpack.c.l.b16 %v310
        %v474 = vunpack.c.h.b16 %v310
        %v475 = vunpack.c.l.b16 %v311
        %v476 = vunpack.c.h.b16 %v311
        %v477 = vunpack.c.l.b16 %v312
        %v478 = vunpack.c.h.b16 %v312
        %v479 = vunpack.c.l.b16 %v313
        %v480 = vunpack.c.h.b16 %v313
        %v481 = vunpack.c.l.b16 %v314
        %v482 = vunpack.c.h.b16 %v314
        %v483 = vunpack.c.l.b16 %v315
        %v484 = vunpack.c.h.b16 %v315
        %v485 = vunpack.c.l.b16 %v316
        %v486 = vunpack.c.h.b16 %v316
        %v487 = vunpack.c.l.b16 %v317
        %v488 = vunpack.c.h.b16 %v317
        %v489 = vunpack.c.l.b16 %v318
        %v490 = vunpack.c.h.b16 %v318
        %v491 = vunpack.c.l.b16 %v319
        %v492 = vunpack.c.h.b16 %v319
        %v493 = vunpack.c.l.b16 %v320
        %v494 = vunpack.c.h.b16 %v320
        %v495 = vunpack.c.l.b16 %v321
        %v496 = vunpack.c.h.b16 %v321
        %v497 = vunpack.c.l.b16 %v322
        %v498 = vunpack.c.h.b16 %v322
        %v499 = vunpack.c.l.b16 %v323
        %v500 = vunpack.c.h.b16 %v323
        %v501 = vunpack.c.l.b16 %v324
        %v502 = vunpack.c.h.b16 %v324
        %v503 = vunpack.c.l.b16 %v325
        %v504 = vunpack.c.h.b16 %v325
        %v505 = vunpack.c.l.b16 %v326
        %v506 = vunpack.c.h.b16 %v326
        %v507 = vunpack.c.l.b16 %v327
        %v508 = vunpack.c.h.b16 %v327
        %v509 = vunpack.c.l.b16 %v328
        %v510 = vunpack.c.h.b16 %v328
        %v511 = vunpack.c.l.b16 %v329
        %v512 = vunpack.c.h.b16 %v329
        %v513 = vunpack.c.l.b16 %v330
        %v514 = vunpack.c.h.b16 %v330
        %v515 = vunpack.c.l.b16 %v331
        %v516 = vunpack.c.h.b16 %v331
        %v517 = vunpack.c.l.b16 %v332
        %v518 = vunpack.c.h.b16 %v332
        %v519 = vunpack.c.l.b16 %v333
        %v520 = vunpack.c.h.b16 %v333
        %v521 = vunpack.c.l.b16 %v334
        %v522 = vunpack.c.h.b16 %v334
        %v523 = vunpack.c.l.b16 %v335
        %v524 = vunpack.c.h.b16 %v335
        %v525 = vunpack.c.l.b16 %v336
        %v526 = vunpack.c.h.b16 %v336
        %v527 = vunpack.c.l.b16 %v337
        %v528 = vunpack.c.h.b16 %v337
        %v529 = vunpack.c.l.b16 %v338
        %v530 = vunpack.c.h.b16 %v338
        %v531 = vunpack.c.l.b16 %v339
        %v532 = vunpack.c.h.b16 %v339
        %v533 = vunpack.c.l.b16 %v340
        %v534 = vunpack.c.h.b16 %v340
        %v535 = vunpack.c.l.b16 %v341
        %v536 = vunpack.c.h.b16 %v341
        %v537 = vunpack.c.l.b16 %v342
        %v538 = vunpack.c.h.b16 %v342
        %v539 = vunpack.c.l.b16 %v343
        %v540 = vunpack.c.h.b16 %v343
        %v541 = vunpack.c.l.b16 %v344
        %v542 = vunpack.c.h.b16 %v344
        %v543 = vunpack.c.l.b16 %v345
        %v544 = vunpack.c.h.b16 %v345
        %v545 = vunpack.c.l.b16 %v346
        %v546 = vunpack.c.h.b16 %v346
        %v547 = vunpack.c.l.b16 %v347
        %v548 = vunpack.c.h.b16 %v347
        %v549 = vunpack.c.l.b16 %v348
        %v550 = vunpack.c.h.b16 %v348
        %v551 = vpack.c.b16 %v427, %v423
        %v552 = vpack.c.b16 %v428, %v424
        %v553 = vpack.c.b16 %v429, %v425
        %v554 = vpack.c.b16 %v430, %v426
        %v555 = vpack.c.b16 %v435, %v431
        %v556 = vpack.c.b16 %v436, %v432
        %v557 = vpack.c.b16 %v437, %v433
        %v558 = vpack.c.b16 %v438, %v434
        %v559 = vpack.c.b16 %v443, %v439
        %v560 = vpack.c.b16 %v444, %v440
        %v561 = vpack.c.b16 %v445, %v441
        %v562 = vpack.c.b16 %v446, %v442
        %v563 = vpack.c.b16 %v451, %v447
        %v564 = vpack.c.b16 %v452, %v448
        %v565 = vpack.c.b16 %v453, %v449
        %v566 = vpack.c.b16 %v454, %v450
        %v567 = vpack.c.b16 %v459, %v455
        %v568 = vpack.c.b16 %v460, %v456
        %v569 = vpack.c.b16 %v461, %v457
        %v570 = vpack.c.b16 %v462, %v458
        %v571 = vpack.c.b16 %v467, %v463
        %v572 = vpack.c.b16 %v468, %v464
        %v573 = vpack.c.b16 %v469, %v465
        %v574 = vpack.c.b16 %v470, %v466
        %v575 = vpack.c.b16 %v475, %v471
        %v576 = vpack.c.b16 %v476, %v472
        %v577 = vpack.c.b16 %v477, %v473
        %v578 = vpack.c.b16 %v478, %v474
        %v579 = vpack.c.b16 %v483, %v479
        %v580 = vpack.c.b16 %v484, %v480
        %v581 = vpack.c.b16 %v485, %v481
        %v582 = vpack.c.b16 %v486, %v482
        %v583 = vpack.c.b16 %v491, %v487
        %v584 = vpack.c.b16 %v492, %v488
        %v585 = vpack.c.b16 %v493, %v489
        %v586 = vpack.c.b16 %v494, %v490
        %v587 = vpack.c.b16 %v499, %v495
        %v588 = vpack.c.b16 %v500, %v496
        %v589 = vpack.c.b16 %v501, %v497
        %v590 = vpack.c.b16 %v502, %v498
        %v591 = vpack.c.b16 %v507, %v503
        %v592 = vpack.c.b16 %v508, %v504
        %v593 = vpack.c.b16 %v509, %v505
        %v594 = vpack.c.b16 %v510, %v506
        %v595 = vpack.c.b16 %v515, %v511
        %v596 = vpack.c.b16 %v516, %v512
        %v597 = vpack.c.b16 %v517, %v513
        %v598 = vpack.c.b16 %v518, %v514
        %v599 = vpack.c.b16 %v523, %v519
        %v600 = vpack.c.b16 %v524, %v520
        %v601 = vpack.c.b16 %v525, %v521
        %v602 = vpack.c.b16 %v526, %v522
        %v603 = vpack.c.b16 %v531, %v527
        %v604 = vpack.c.b16 %v532, %v528
        %v605 = vpack.c.b16 %v533, %v529
        %v606 = vpack.c.b16 %v534, %v530
        %v607 = vpack.c.b16 %v539, %v535
        %v608 = vpack.c.b16 %v540, %v536
        %v609 = vpack.c.b16 %v541, %v537
        %v610 = vpack.c.b16 %v542, %v538
        %v611 = vpack.c.b16 %v547, %v543
        %v612 = vpack.c.b16 %v548, %v544
        %v613 = vpack.c.b16 %v549, %v545
        %v614 = vpack.c.b16 %v550, %v546
        %679 = vmatprep.subr.bf16.mxu0 %v580
        %680 = vmatpush1.bf16.msra.mxu0 %v579
        %681 = vmatprep.subr.bf16.mxu0 %v576
        %682 = vmatpush1.bf16.msra.mxu0 %v575
        %683 = vmatprep.subr.bf16.mxu0 %v572
        %684 = vmatpush1.bf16.msra.mxu0 %v571
        %685 = vmatprep.subr.bf16.mxu0 %v568
        %686 = vmatpush1.bf16.msra.mxu0 %v567
        %687 = vmatprep.subr.bf16.mxu0 %v564
        %688 = vmatpush1.bf16.msra.mxu0 %v563
        %689 = vmatprep.subr.bf16.mxu0 %v560
        %690 = vmatpush1.bf16.msra.mxu0 %v559
        %691 = vmatprep.subr.bf16.mxu0 %v556
        %692 = vmatpush1.bf16.msra.mxu0 %v555
        %693 = vmatprep.subr.bf16.mxu0 %v552
        %694 = vmatpush1.bf16.msra.mxu0 %v551
        %695 = vmatprep.subr.bf16.mxu0 %v612
        %696 = vmatpush2.bf16.msra.mxu0 %v611
        %697 = vmatprep.subr.bf16.mxu0 %v608
        %698 = vmatpush2.bf16.msra.mxu0 %v607
        %699 = vmatprep.subr.bf16.mxu0 %v604
        %700 = vmatpush2.bf16.msra.mxu0 %v603
        %701 = vmatprep.subr.bf16.mxu0 %v600
        %702 = vmatpush2.bf16.msra.mxu0 %v599
        %703 = vmatprep.subr.bf16.mxu0 %v596
        %704 = vmatpush2.bf16.msra.mxu0 %v595
        %705 = vmatprep.subr.bf16.mxu0 %v592
        %706 = vmatpush2.bf16.msra.mxu0 %v591
        %707 = vmatprep.subr.bf16.mxu0 %v588
        %708 = vmatpush2.bf16.msra.mxu0 %v587
        %709 = vmatprep.subr.bf16.mxu0 %v584
        %710 = vmatpush2.bf16.msra.mxu0 %v583
        %711 = vmatprep.mubr.bf16.mxu0 %v356
        %712 = vmatmul.mubr.bf16.gmra.mxu0 %v355
        %v713 = vpop.f32.mrf.mxu0
        %v714 = vadd.f32 0.0, %v713
        %v715 = vpop.f32.mrf.mxu0
        %v716 = vadd.f32 0.0, %v715
        %v717 = vpop.f32.mrf.mxu0
        %v718 = vadd.f32 0.0, %v717
        %v719 = vpop.f32.mrf.mxu0
        %v720 = vadd.f32 0.0, %v719
        %721 = vdwg.mxu0
        %722 = vmatprep.subr.bf16.mxu0 %v582
        %723 = vmatpush1.bf16.msra.mxu0 %v581
        %724 = vmatprep.subr.bf16.mxu0 %v578
        %725 = vmatpush1.bf16.msra.mxu0 %v577
        %726 = vmatprep.subr.bf16.mxu0 %v574
        %727 = vmatpush1.bf16.msra.mxu0 %v573
        %728 = vmatprep.subr.bf16.mxu0 %v570
        %729 = vmatpush1.bf16.msra.mxu0 %v569
        %730 = vmatprep.subr.bf16.mxu0 %v566
        %731 = vmatpush1.bf16.msra.mxu0 %v565
        %732 = vmatprep.subr.bf16.mxu0 %v562
        %733 = vmatpush1.bf16.msra.mxu0 %v561
        %734 = vmatprep.subr.bf16.mxu0 %v558
        %735 = vmatpush1.bf16.msra.mxu0 %v557
        %736 = vmatprep.subr.bf16.mxu0 %v554
        %737 = vmatpush1.bf16.msra.mxu0 %v553
        %738 = vmatprep.subr.bf16.mxu0 %v614
        %739 = vmatpush2.bf16.msra.mxu0 %v613
        %740 = vmatprep.subr.bf16.mxu0 %v610
        %741 = vmatpush2.bf16.msra.mxu0 %v609
        %742 = vmatprep.subr.bf16.mxu0 %v606
        %743 = vmatpush2.bf16.msra.mxu0 %v605
        %744 = vmatprep.subr.bf16.mxu0 %v602
        %745 = vmatpush2.bf16.msra.mxu0 %v601
        %746 = vmatprep.subr.bf16.mxu0 %v598
        %747 = vmatpush2.bf16.msra.mxu0 %v597
        %748 = vmatprep.subr.bf16.mxu0 %v594
        %749 = vmatpush2.bf16.msra.mxu0 %v593
        %750 = vmatprep.subr.bf16.mxu0 %v590
        %751 = vmatpush2.bf16.msra.mxu0 %v589
        %752 = vmatprep.subr.bf16.mxu0 %v586
        %753 = vmatpush2.bf16.msra.mxu0 %v585
        %754 = vmatprep.mubr.bf16.mxu0 %v356
        %755 = vmatmul.mubr.bf16.gmra.mxu0 %v355
        %v756 = vpop.f32.mrf.mxu0
        %v757 = vadd.f32 0.0, %v756
        %v758 = vpop.f32.mrf.mxu0
        %v759 = vadd.f32 0.0, %v758
        %v760 = vpop.f32.mrf.mxu0
        %v761 = vadd.f32 0.0, %v760
        %v762 = vpop.f32.mrf.mxu0
        %v763 = vadd.f32 0.0, %v762
        %764 = vdwg.mxu0
        %v765 = vxor.u32 %v714, 2147483648
        %v766 = vxor.u32 %v716, 2147483648
        %v767 = vxor.u32 %v718, 2147483648
        %v768 = vxor.u32 %v720, 2147483648
        %v769 = vmul.f32 %v765, 1.442695
        %v770 = vpow.pop %v769
        %v771 = vmul.f32 %v766, 1.442695
        %v772 = vpow.pop %v771
        %v773 = vmul.f32 %v767, 1.442695
        %v774 = vpow.pop %v773
        %v775 = vmul.f32 %v768, 1.442695
        %v776 = vpow.pop %v775
        %v777 = vadd.f32 %v770, 1.0
        %v778 = vadd.f32 %v772, 1.0
        %v779 = vadd.f32 %v774, 1.0
        %v780 = vadd.f32 %v776, 1.0
        %v781 = vrcp.pop %v777
        %v782 = vmul.f32 1.0, %v781
        %v783 = vrcp.pop %v778
        %v784 = vmul.f32 1.0, %v783
        %v785 = vrcp.pop %v779
        %v786 = vmul.f32 1.0, %v785
        %v787 = vrcp.pop %v780
        %v788 = vmul.f32 1.0, %v787
        %v789 = vmul.f32 %v714, %v782
        %v790 = vmul.f32 %v716, %v784
        %v791 = vmul.f32 %v718, %v786
        %v792 = vmul.f32 %v720, %v788
        %v793 = vmul.f32 %v789, %v757
        %v794 = vmul.f32 %v790, %v759
        %v795 = vmul.f32 %v791, %v761
        %v796 = vmul.f32 %v792, %v763
        %v797 = vld [vmem:[#allocation2] sm:$0xff]
        %v798 = vld [vmem:[#allocation2 + $0x8] sm:$0xff]
        %v799 = vld [vmem:[#allocation2 + $0x10] sm:$0xff]
        %v800 = vld [vmem:[#allocation2 + $0x18] sm:$0xff]
        %v801 = vpack.c.bf16 %v795, %v793
        %v802 = vpack.c.bf16 %v796, %v794
        %v803 = vld [vmem:[%s246] sm:$0xff]
        %v804 = vld [vmem:[%s246 + $0x8] sm:$0xff]
        %v805 = vld [vmem:[%s246 + $0x10] sm:$0xff]
        %v806 = vld [vmem:[%s246 + $0x18] sm:$0xff]
        %v807 = vld [vmem:[%s246 + $0x20] sm:$0xff]
        %v808 = vld [vmem:[%s246 + $0x28] sm:$0xff]
        %v809 = vld [vmem:[%s246 + $0x30] sm:$0xff]
        %v810 = vld [vmem:[%s246 + $0x38] sm:$0xff]
        %v811 = vld [vmem:[%s246 + $0x40] sm:$0xff]
        %v812 = vld [vmem:[%s246 + $0x48] sm:$0xff]
        %v813 = vld [vmem:[%s246 + $0x50] sm:$0xff]
        %v814 = vld [vmem:[%s246 + $0x58] sm:$0xff]
        %v815 = vld [vmem:[%s246 + $0x60] sm:$0xff]
        %v816 = vld [vmem:[%s246 + $0x68] sm:$0xff]
        %v817 = vld [vmem:[%s246 + $0x70] sm:$0xff]
        %v818 = vld [vmem:[%s246 + $0x78] sm:$0xff]
        %v819 = vld [vmem:[%s246 + $0x80] sm:$0xff]
        %v820 = vld [vmem:[%s246 + $0x88] sm:$0xff]
        %v821 = vld [vmem:[%s246 + $0x90] sm:$0xff]
        %v822 = vld [vmem:[%s246 + $0x98] sm:$0xff]
        %v823 = vld [vmem:[%s246 + $0xa0] sm:$0xff]
        %v824 = vld [vmem:[%s246 + $0xa8] sm:$0xff]
        %v825 = vld [vmem:[%s246 + $0xb0] sm:$0xff]
        %v826 = vld [vmem:[%s246 + $0xb8] sm:$0xff]
        %v827 = vld [vmem:[%s246 + $0xc0] sm:$0xff]
        %v828 = vld [vmem:[%s246 + $0xc8] sm:$0xff]
        %v829 = vld [vmem:[%s246 + $0xd0] sm:$0xff]
        %v830 = vld [vmem:[%s246 + $0xd8] sm:$0xff]
        %v831 = vld [vmem:[%s246 + $0xe0] sm:$0xff]
        %v832 = vld [vmem:[%s246 + $0xe8] sm:$0xff]
        %v833 = vld [vmem:[%s246 + $0xf0] sm:$0xff]
        %v834 = vld [vmem:[%s246 + $0xf8] sm:$0xff]
        %v867 = vunpack.c.l.b16 %v803
        %v868 = vunpack.c.h.b16 %v803
        %v869 = vunpack.c.l.b16 %v804
        %v870 = vunpack.c.h.b16 %v804
        %v871 = vunpack.c.l.b16 %v805
        %v872 = vunpack.c.h.b16 %v805
        %v873 = vunpack.c.l.b16 %v806
        %v874 = vunpack.c.h.b16 %v806
        %v875 = vunpack.c.l.b16 %v807
        %v876 = vunpack.c.h.b16 %v807
        %v877 = vunpack.c.l.b16 %v808
        %v878 = vunpack.c.h.b16 %v808
        %v879 = vunpack.c.l.b16 %v809
        %v880 = vunpack.c.h.b16 %v809
        %v881 = vunpack.c.l.b16 %v810
        %v882 = vunpack.c.h.b16 %v810
        %v883 = vunpack.c.l.b16 %v811
        %v884 = vunpack.c.h.b16 %v811
        %v885 = vunpack.c.l.b16 %v812
        %v886 = vunpack.c.h.b16 %v812
        %v887 = vunpack.c.l.b16 %v813
        %v888 = vunpack.c.h.b16 %v813
        %v889 = vunpack.c.l.b16 %v814
        %v890 = vunpack.c.h.b16 %v814
        %v891 = vunpack.c.l.b16 %v815
        %v892 = vunpack.c.h.b16 %v815
        %v893 = vunpack.c.l.b16 %v816
        %v894 = vunpack.c.h.b16 %v816
        %v895 = vunpack.c.l.b16 %v817
        %v896 = vunpack.c.h.b16 %v817
        %v897 = vunpack.c.l.b16 %v818
        %v898 = vunpack.c.h.b16 %v818
        %v899 = vunpack.c.l.b16 %v819
        %v900 = vunpack.c.h.b16 %v819
        %v901 = vunpack.c.l.b16 %v820
        %v902 = vunpack.c.h.b16 %v820
        %v903 = vunpack.c.l.b16 %v821
        %v904 = vunpack.c.h.b16 %v821
        %v905 = vunpack.c.l.b16 %v822
        %v906 = vunpack.c.h.b16 %v822
        %v907 = vunpack.c.l.b16 %v823
        %v908 = vunpack.c.h.b16 %v823
        %v909 = vunpack.c.l.b16 %v824
        %v910 = vunpack.c.h.b16 %v824
        %v911 = vunpack.c.l.b16 %v825
        %v912 = vunpack.c.h.b16 %v825
        %v913 = vunpack.c.l.b16 %v826
        %v914 = vunpack.c.h.b16 %v826
        %v915 = vunpack.c.l.b16 %v827
        %v916 = vunpack.c.h.b16 %v827
        %v917 = vunpack.c.l.b16 %v828
        %v918 = vunpack.c.h.b16 %v828
        %v919 = vunpack.c.l.b16 %v829
        %v920 = vunpack.c.h.b16 %v829
        %v921 = vunpack.c.l.b16 %v830
        %v922 = vunpack.c.h.b16 %v830
        %v923 = vunpack.c.l.b16 %v831
        %v924 = vunpack.c.h.b16 %v831
        %v925 = vunpack.c.l.b16 %v832
        %v926 = vunpack.c.h.b16 %v832
        %v927 = vunpack.c.l.b16 %v833
        %v928 = vunpack.c.h.b16 %v833
        %v929 = vunpack.c.l.b16 %v834
        %v930 = vunpack.c.h.b16 %v834
        %v931 = vpack.c.b16 %v869, %v867
        %v932 = vpack.c.b16 %v870, %v868
        %v933 = vpack.c.b16 %v873, %v871
        %v934 = vpack.c.b16 %v874, %v872
        %v935 = vpack.c.b16 %v877, %v875
        %v936 = vpack.c.b16 %v878, %v876
        %v937 = vpack.c.b16 %v881, %v879
        %v938 = vpack.c.b16 %v882, %v880
        %v939 = vpack.c.b16 %v885, %v883
        %v940 = vpack.c.b16 %v886, %v884
        %v941 = vpack.c.b16 %v889, %v887
        %v942 = vpack.c.b16 %v890, %v888
        %v943 = vpack.c.b16 %v893, %v891
        %v944 = vpack.c.b16 %v894, %v892
        %v945 = vpack.c.b16 %v897, %v895
        %v946 = vpack.c.b16 %v898, %v896
        %v947 = vpack.c.b16 %v901, %v899
        %v948 = vpack.c.b16 %v902, %v900
        %v949 = vpack.c.b16 %v905, %v903
        %v950 = vpack.c.b16 %v906, %v904
        %v951 = vpack.c.b16 %v909, %v907
        %v952 = vpack.c.b16 %v910, %v908
        %v953 = vpack.c.b16 %v913, %v911
        %v954 = vpack.c.b16 %v914, %v912
        %v955 = vpack.c.b16 %v917, %v915
        %v956 = vpack.c.b16 %v918, %v916
        %v957 = vpack.c.b16 %v921, %v919
        %v958 = vpack.c.b16 %v922, %v920
        %v959 = vpack.c.b16 %v925, %v923
        %v960 = vpack.c.b16 %v926, %v924
        %v961 = vpack.c.b16 %v929, %v927
        %v962 = vpack.c.b16 %v930, %v928
        %995 = vmatprep.subr.bf16.mxu0 %v946
        %996 = vmatpush1.bf16.msra.mxu0 %v945
        %997 = vmatprep.subr.bf16.mxu0 %v944
        %998 = vmatpush1.bf16.msra.mxu0 %v943
        %999 = vmatprep.subr.bf16.mxu0 %v942
        %1000 = vmatpush1.bf16.msra.mxu0 %v941
        %1001 = vmatprep.subr.bf16.mxu0 %v940
        %1002 = vmatpush1.bf16.msra.mxu0 %v939
        %1003 = vmatprep.subr.bf16.mxu0 %v938
        %1004 = vmatpush1.bf16.msra.mxu0 %v937
        %1005 = vmatprep.subr.bf16.mxu0 %v936
        %1006 = vmatpush1.bf16.msra.mxu0 %v935
        %1007 = vmatprep.subr.bf16.mxu0 %v934
        %1008 = vmatpush1.bf16.msra.mxu0 %v933
        %1009 = vmatprep.subr.bf16.mxu0 %v932
        %1010 = vmatpush1.bf16.msra.mxu0 %v931
        %1011 = vmatprep.subr.bf16.mxu0 %v962
        %1012 = vmatpush2.bf16.msra.mxu0 %v961
        %1013 = vmatprep.subr.bf16.mxu0 %v960
        %1014 = vmatpush2.bf16.msra.mxu0 %v959
        %1015 = vmatprep.subr.bf16.mxu0 %v958
        %1016 = vmatpush2.bf16.msra.mxu0 %v957
        %1017 = vmatprep.subr.bf16.mxu0 %v956
        %1018 = vmatpush2.bf16.msra.mxu0 %v955
        %1019 = vmatprep.subr.bf16.mxu0 %v954
        %1020 = vmatpush2.bf16.msra.mxu0 %v953
        %1021 = vmatprep.subr.bf16.mxu0 %v952
        %1022 = vmatpush2.bf16.msra.mxu0 %v951
        %1023 = vmatprep.subr.bf16.mxu0 %v950
        %1024 = vmatpush2.bf16.msra.mxu0 %v949
        %1025 = vmatprep.subr.bf16.mxu0 %v948
        %1026 = vmatpush2.bf16.msra.mxu0 %v947
        %1027 = vmatprep.mubr.bf16.mxu0 %v802
        %1028 = vmatmul.mubr.bf16.gmra.mxu0 %v801
        %v1029 = vpop.f32.mrf.mxu0
        %v1030 = vadd.f32 0.0, %v1029
        %v1031 = vpop.f32.mrf.mxu0
        %v1032 = vadd.f32 0.0, %v1031
        %v1033 = vpop.f32.mrf.mxu0
        %v1034 = vadd.f32 0.0, %v1033
        %v1035 = vpop.f32.mrf.mxu0
        %v1036 = vadd.f32 0.0, %v1035
        %1037 = vdwg.mxu0
        %v1038 = vadd.f32 %v797, %v1030
        %v1039 = vadd.f32 %v798, %v1032
        %v1040 = vadd.f32 %v799, %v1034
        %v1041 = vadd.f32 %v800, %v1036
        %1042 = vst [vmem:[#allocation2] sm:$0xff] %v1038
        %1043 = vst [vmem:[#allocation2 + $0x8] sm:$0xff] %v1039
        %1044 = vst [vmem:[#allocation2 + $0x10] sm:$0xff] %v1040
        %1045 = vst [vmem:[#allocation2 + $0x18] sm:$0xff] %v1041
        %p1046 = scmp.eq.s32.totalorder %s26, 1
        // Predicated region
        $region49: #{tpu_custom_call.1} parent=31 // pred_check
          %p1047 = pneg %p1046
        $region50: #{tpu_custom_call.1} parent=31 // pred_check_branch
          %1049 = sbr.rel (%p1047) target = $region52
        $region51: #{tpu_custom_call.1} parent=31 // pred_region
          %v1050 = vld [vmem:[#allocation2] sm:$0xff]
          %v1051 = vld [vmem:[#allocation2 + $0x8] sm:$0xff]
          %v1052 = vld [vmem:[#allocation2 + $0x10] sm:$0xff]
          %v1053 = vld [vmem:[#allocation2 + $0x18] sm:$0xff]
          %v1054 = vpack.c.bf16 %v1052, %v1050
          %v1055 = vpack.c.bf16 %v1053, %v1051
          %v1058 = vunpack.c.l.b16 %v1054
          %v1059 = vunpack.c.l.b16 %v1055
          %v1060 = vunpack.c.h.b16 %v1054
          %v1061 = vunpack.c.h.b16 %v1055
          %v1062 = vpack.c.b16 %v1059, %v1058
          %v1063 = vpack.c.b16 %v1061, %v1060
          %1066 = vst [vmem:[#allocation9] sm:$0xff] %v1062
          %1067 = vst [vmem:[#allocation9 + $0x8] sm:$0xff] %v1063
        $region52: #{tpu_custom_call.1} parent=31 // pred_fallthru
          _
        // Predicated region
        $region53: #{tpu_custom_call.1} parent=31 // pred_check
          %p1068 = pneg %p138
        $region54: #{tpu_custom_call.1} parent=31 // pred_check_branch
          %1070 = sbr.rel (%p1068) target = $region56
        $region55: #{tpu_custom_call.1} parent=31 // pred_region
          %s1071 = smul.u32 2, %s25
          %s1072 = smul.u32 2, %s24
          %s1074 = ssub.s32 256, 256
          %1075 = vsyncadd [#allocation5], %s1074
          %s1076 = smul.addr %s1071, 2
          %s1077 = sadd.s32 %s1072, %s1076
          %s1078 = smul.addr %s1077, 64
          %s1079 = scalar_lea.hbm %s3, %s1078
          %s1080 = sshll.u32 [#allocation9], 4
          %s1081 = int_to_ptr.vmem [resolvable:$true] %s1080
          %1086 = dma.vmem_to_hbm [thread:$0]  %s1081, 256, %s1079, [#allocation5], 128, 128, 8
        $region56: #{tpu_custom_call.1} parent=31 // pred_fallthru
          _
        // Predicated region
        $region57: #{tpu_custom_call.1} parent=31 // pred_check
          %p1087 = pneg %p138
        $region58: #{tpu_custom_call.1} parent=31 // pred_check_branch
          %1089 = sbr.rel (%p1087) target = $region60
        $region59: #{tpu_custom_call.1} parent=31 // pred_region
          %1090 = dma.done [#allocation5], 256
        $region60: #{tpu_custom_call.1} parent=31 // pred_fallthru
          _
      $region32: #{tpu_custom_call.1} parent=5 // pred_fallthru
        _
      %p1091 = scmp.le.s32.totalorder 2, %s14
      // Predicated region
      $region61: #{tpu_custom_call.1} parent=5 // pred_check
        %p1092 = pneg %p1091
      $region62: #{tpu_custom_call.1} parent=5 // pred_check_branch
        %1094 = sbr.rel (%p1092) target = $region64
      $region63: #{tpu_custom_call.1} parent=5 // pred_region
        %s1095 = ssub.s32 %s14, 2
      $region64: #{tpu_custom_call.1} parent=5 // pred_fallthru
        _
    $region6: #{tpu_custom_call.1} parent=1 // loop_footer
      %s18 = sadd.s32 1, %s14
    $region7: #{tpu_custom_call.1} parent=1 // loop_footer_branch
      %13 = sbr.rel target = $region3
    $region8: #{tpu_custom_call.1} parent=1 // loop_exit
      _
    %1096 = vsyncpa [#allocation4], 1
    %s1097 = scalar_lea.sflag [#allocation4], 1
    %1098 = vsyncpa %s1097, 1
    %1099 = vsyncpa [#allocation7], 1
    %s1100 = scalar_lea.sflag [#allocation7], 1
    %1101 = vsyncpa %s1100, 1
    %1102 = vsyncpa [#allocation5], 1
    %s1103 = scalar_lea.sflag [#allocation5], 1
    %1104 = vsyncpa %s1103, 1

</llo_original>
